<compile_context>
chip_gen: v7x
topology: tpu7x:2x2x1
jax: 0.10.0
libtpu: 0.0.40
codegen_flags: <defaults>
</compile_context>

<pallas_src>
import functools
import math

import jax
import jax.numpy as jnp
from jax.experimental import pallas as pl
from jax.experimental.pallas import tpu as pltpu


# ----------------------------------------------------------------------------
# Fused kernel: emb*sqrt(d_model) + pe[0]  ->  LayerNorm  ->  Linear(D,1) -> sigmoid
# ----------------------------------------------------------------------------
def _fused_forward_kernel(alpha_ref, beta_ref, bhead_ref, emb_ref, pe_ref, w_ref,
                          o_ref, *, scale, eps, n):
    """One (TILE_B, D) tile of position-0 rows.

    alpha_ref / beta_ref / bhead_ref : SMEM scalars, shape (1,).
    emb_ref : (TILE_B, D) gathered embedding rows (tokens[:, 0]).
    pe_ref  : (1, D) positional-encoding row 0 (resident across the grid).
    w_ref   : (1, D) output-head weight (PyTorch nn.Linear(d_model, 1) layout, resident).
    o_ref   : (TILE_B, 1) sigmoid(logit) output tile.
    """
    x = (emb_ref[...].astype(jnp.float32) * jnp.float32(scale)
         + pe_ref[...].astype(jnp.float32))                   # (TILE_B, D)
    n_f = jnp.float32(n)
    mean = jnp.sum(x, axis=-1, keepdims=True) / n_f
    diff = x - mean
    # torch.std is unbiased (ddof=1); requires d_model > 1 (asserted in the wrapper).
    var = jnp.sum(diff * diff, axis=-1, keepdims=True) / jnp.float32(n - 1)
    std = jnp.sqrt(var)
    # Fold alpha into a per-row scale so full-tile elementwise work is one mul + add;
    # the reciprocal goes to the EUP slot (free vs. the VPU work).
    row_scale = alpha_ref[0] * pl.reciprocal(std + jnp.float32(eps), approx=False)
    ln = diff * row_scale + beta_ref[0]
    # Output head: single output feature -> a VPU multiply + lane-reduce, no MXU needed.
    logit = (jnp.sum(ln * w_ref[...].astype(jnp.float32), axis=-1, keepdims=True)
             + bhead_ref[0])
    o_ref[...] = (1.0 / (1.0 + jnp.exp(-logit))).astype(o_ref.dtype)


def _choose_tile_rows(rows, hidden, itemsize):
    """Largest batch-row tile whose pipeline buffers + f32 temporaries fit the budget.

    Per row we account for:
      * double-buffered input tile:           2 * hidden * itemsize
      * in-kernel f32 temporaries (x, diff):  ~2 * hidden * 4 bytes
    A ~36 MiB budget is large enough to amortize the ~0.35 us per-grid-step overhead
    even at v7x's 3.2 TB/s HBM, and fits under v7x's 64 MiB physical VMEM with
    vmem_limit_bytes = 56 MiB (v5e/v6e have 128 MiB physical, so this is safe there).
    """
    budget_bytes = 36 * 1024 * 1024
    bytes_per_row = hidden * (2 * itemsize + 8)
    t = budget_bytes // max(bytes_per_row, 1)
    t = int(max(8, min(t, 1024)))
    t -= t % 8                      # keep the sublane dim a multiple of 8
    if rows <= t:
        return rows                 # single full-extent block (always legal)
    return t


def fused_row_forward(emb0, pe0, alpha, beta, w_out, b_out, *, scale, eps):
    """emb0: [B, D] gathered rows; pe0 / w_out: [1, D]; alpha/beta/b_out: shape (1,)."""
    B, D = emb0.shape
    assert D > 1, "LayerNormalization with unbiased std requires d_model > 1"

    tile_b = _choose_tile_rows(B, D, jnp.dtype(emb0.dtype).itemsize)
    grid = (pl.cdiv(B, tile_b),)
    kernel = functools.partial(_fused_forward_kernel,
                               scale=float(scale), eps=float(eps), n=D)

    return pl.pallas_call(
        kernel,
        out_shape=jax.ShapeDtypeStruct((B, 1), emb0.dtype),
        grid=grid,
        in_specs=[
            pl.BlockSpec(memory_space=pltpu.SMEM),           # ln alpha   (1,)
            pl.BlockSpec(memory_space=pltpu.SMEM),           # ln bias    (1,)
            pl.BlockSpec(memory_space=pltpu.SMEM),           # head bias  (1,)
            pl.BlockSpec((tile_b, D), lambda i: (i, 0)),     # emb0 row tile (pipelined)
            pl.BlockSpec((1, D), lambda i: (0, 0)),          # pe row 0   (resident)
            pl.BlockSpec((1, D), lambda i: (0, 0)),          # head weight (resident)
        ],
        out_specs=pl.BlockSpec((tile_b, 1), lambda i: (i, 0)),
        compiler_params=pltpu.CompilerParams(
            # "parallel" lets the batch-tile axis shard across TensorCores on v7x.
            dimension_semantics=("parallel",),
            vmem_limit_bytes=56 * 1024 * 1024,   # < 64 MiB physical VMEM on v7x
        ),
    )(alpha, beta, b_out, emb0, pe0, w_out)


# ----------------------------------------------------------------------------
# Full forward (mask=None path, matching the PyTorch control flow)
# ----------------------------------------------------------------------------
def transformer_forward(tokens, params, eps=1e-6, mask=None):
    """Matches Transformer.forward with mask=None (dropout = identity at inference)."""
    d_model = params["embedding"].shape[1]
    # TODO(synk): mask != None encoder path (MHA + FeedForward residual layers) not
    # implemented; with mask=None the PyTorch encoder-layer loop body never runs and
    # the encoder is exactly the final LayerNormalization.
    #
    # Dead-work elimination (exact): the output head reads only x[:, 0, :] and both
    # embed+PE and LayerNorm are row-independent, so gather only the position-0 tokens.
    # The [B, D] row gather stays in XLA (data-dependent gather; negligible traffic).
    emb0 = jnp.take(params["embedding"], tokens[:, 0], axis=0)   # [B, D]
    pe0 = params["pe"][0:1, :]                                    # [1, D]
    return fused_row_forward(emb0, pe0,
                             params["ln_alpha"], params["ln_bias"],
                             params["w_out"], params["b_out"],
                             scale=math.sqrt(d_model), eps=eps)


if __name__ == "__main__":
    batch, seq, d_model, vocab = 2, 8, 32, 100
    eps = 1e-6

    key = jax.random.PRNGKey(0)
    k_tok, k_emb, k_w = jax.random.split(key, 3)

    tokens = jax.random.randint(k_tok, (batch, seq), 0, vocab)
    embedding = jax.random.normal(k_emb, (vocab, d_model), dtype=jnp.float32)

    # Positional encoding table, exactly as in the PyTorch module.
    position = jnp.arange(seq, dtype=jnp.float32)[:, None]
    div_term = jnp.exp(jnp.arange(0, d_model, 2, dtype=jnp.float32)
                       * (-math.log(10000.0) / d_model))
    pe = jnp.zeros((seq, d_model), dtype=jnp.float32)
    pe = pe.at[:, 0::2].set(jnp.sin(position * div_term))
    pe = pe.at[:, 1::2].set(jnp.cos(position * div_term))

    params = {
        "embedding": embedding,
        "pe": pe,
        "ln_alpha": jnp.ones((1,), dtype=jnp.float32),   # nn.Parameter(torch.ones(1))
        "ln_bias": jnp.zeros((1,), dtype=jnp.float32),   # nn.Parameter(torch.zeros(1))
        "w_out": jax.random.normal(k_w, (1, d_model), dtype=jnp.float32) * 0.1,
        "b_out": jnp.zeros((1,), dtype=jnp.float32),
    }

    out = transformer_forward(tokens, params, eps=eps, mask=None)
    out = jax.block_until_ready(out)

    # Plain-JAX reference with the same (mask=None) control flow as the PyTorch module,
    # computed over the FULL [B, S, D] tensor to verify the position-0-only fused path.
    ref_x = embedding[tokens] * math.sqrt(d_model) + pe[None, :, :]
    mean = jnp.mean(ref_x, axis=-1, keepdims=True)
    std = jnp.std(ref_x, axis=-1, keepdims=True, ddof=1)     # unbiased, like torch.std
    ref_ln = params["ln_alpha"][0] * (ref_x - mean) / (std + eps) + params["ln_bias"][0]
    ref_out = jax.nn.sigmoid(ref_ln[:, 0, :] @ params["w_out"].T + params["b_out"])

    assert out.shape == (batch, 1)
    assert jnp.allclose(out, ref_out, atol=1e-5, rtol=1e-5), "Transformer forward mismatch"

    print("KERNEL_OK")
</pallas_src>

<mosaic_0001>
module attributes {stable_mosaic.version = 11 : i64} {
  func.func @_fused_forward_kernel(%arg0: i32, %arg1: memref<1xf32, #tpu.memory_space<smem>>, %arg2: memref<1xf32, #tpu.memory_space<smem>>, %arg3: memref<1xf32, #tpu.memory_space<smem>>, %arg4: memref<2x32xf32, #tpu.memory_space<vmem>>, %arg5: memref<1x32xf32, #tpu.memory_space<vmem>>, %arg6: memref<1x32xf32, #tpu.memory_space<vmem>>, %arg7: memref<2x1xf32, #tpu.memory_space<vmem>>) attributes {dimension_semantics = [#tpu.dimension_semantics<parallel>], iteration_bounds = array<i64: 1>, scalar_prefetch = 0 : i64, scratch_operands = 0 : i64, tpu.core_type = #tpu.core_type<tc>, window_params = [{transform_indices = @transform_0, window_bounds = array<i64: 1>}, {transform_indices = @transform_1, window_bounds = array<i64: 1>}, {transform_indices = @transform_2, window_bounds = array<i64: 1>}, {transform_indices = @transform_3, window_bounds = array<i64: 2, 32>}, {pipeline_mode = #tpu.pipeline_mode<synchronous>, transform_indices = @transform_4, window_bounds = array<i64: 1, 32>}, {pipeline_mode = #tpu.pipeline_mode<synchronous>, transform_indices = @transform_5, window_bounds = array<i64: 1, 32>}, {transform_indices = @transform_6, window_bounds = array<i64: 2, 1>}]} {
    %c0 = arith.constant 0 : index
    %c0_0 = arith.constant 0 : index
    %0 = vector.load %arg4[%c0, %c0_0] : memref<2x32xf32, #tpu.memory_space<vmem>>, vector<2x32xf32>
    %cst = arith.constant 5.65685415 : f32
    %1 = vector.broadcast %cst : f32 to vector<2x32xf32>
    %2 = arith.mulf %0, %1 : vector<2x32xf32>
    %c0_1 = arith.constant 0 : index
    %c0_2 = arith.constant 0 : index
    %3 = vector.load %arg5[%c0_1, %c0_2] : memref<1x32xf32, #tpu.memory_space<vmem>>, vector<1x32xf32>
    %4 = vector.broadcast %3 : vector<1x32xf32> to vector<2x32xf32>
    %5 = arith.addf %2, %4 : vector<2x32xf32>
    %cst_3 = arith.constant dense<0.000000e+00> : vector<2xf32>
    %6 = vector.multi_reduction <add>, %5, %cst_3 [1] : vector<2x32xf32> to vector<2xf32>
    %7 = vector.shape_cast %6 : vector<2xf32> to vector<2x1xf32>
    %cst_4 = arith.constant 3.200000e+01 : f32
    %8 = vector.broadcast %cst_4 : f32 to vector<2x1xf32>
    %9 = arith.divf %7, %8 : vector<2x1xf32>
    %10 = vector.broadcast %9 : vector<2x1xf32> to vector<2x32xf32>
    %11 = arith.subf %5, %10 : vector<2x32xf32>
    %12 = arith.mulf %11, %11 : vector<2x32xf32>
    %cst_5 = arith.constant dense<0.000000e+00> : vector<2xf32>
    %13 = vector.multi_reduction <add>, %12, %cst_5 [1] : vector<2x32xf32> to vector<2xf32>
    %14 = vector.shape_cast %13 : vector<2xf32> to vector<2x1xf32>
    %cst_6 = arith.constant 3.100000e+01 : f32
    %15 = vector.broadcast %cst_6 : f32 to vector<2x1xf32>
    %16 = arith.divf %14, %15 : vector<2x1xf32>
    %17 = math.sqrt %16 : vector<2x1xf32>
    %c0_7 = arith.constant 0 : index
    %18 = memref.load %arg1[%c0_7] : memref<1xf32, #tpu.memory_space<smem>>
    %cst_8 = arith.constant 9.99999997E-7 : f32
    %19 = vector.broadcast %cst_8 : f32 to vector<2x1xf32>
    %20 = arith.addf %17, %19 : vector<2x1xf32>
    %21 = tpu.reciprocal %20 : vector<2x1xf32> -> vector<2x1xf32>
    %22 = vector.broadcast %18 : f32 to vector<2x1xf32>
    %23 = arith.mulf %22, %21 : vector<2x1xf32>
    %24 = vector.broadcast %23 : vector<2x1xf32> to vector<2x32xf32>
    %25 = arith.mulf %11, %24 : vector<2x32xf32>
    %c0_9 = arith.constant 0 : index
    %26 = memref.load %arg2[%c0_9] : memref<1xf32, #tpu.memory_space<smem>>
    %27 = vector.broadcast %26 : f32 to vector<2x32xf32>
    %28 = arith.addf %25, %27 : vector<2x32xf32>
    %c0_10 = arith.constant 0 : index
    %c0_11 = arith.constant 0 : index
    %29 = vector.load %arg6[%c0_10, %c0_11] : memref<1x32xf32, #tpu.memory_space<vmem>>, vector<1x32xf32>
    %30 = vector.broadcast %29 : vector<1x32xf32> to vector<2x32xf32>
    %31 = arith.mulf %28, %30 : vector<2x32xf32>
    %cst_12 = arith.constant dense<0.000000e+00> : vector<2xf32>
    %32 = vector.multi_reduction <add>, %31, %cst_12 [1] : vector<2x32xf32> to vector<2xf32>
    %33 = vector.shape_cast %32 : vector<2xf32> to vector<2x1xf32>
    %c0_13 = arith.constant 0 : index
    %34 = memref.load %arg3[%c0_13] : memref<1xf32, #tpu.memory_space<smem>>
    %35 = vector.broadcast %34 : f32 to vector<2x1xf32>
    %36 = arith.addf %33, %35 : vector<2x1xf32>
    %cst_14 = arith.constant 0.000000e+00 : f32
    %37 = vector.broadcast %cst_14 : f32 to vector<2x1xf32>
    %38 = arith.subf %37, %36 : vector<2x1xf32>
    %39 = math.exp %38 : vector<2x1xf32>
    %cst_15 = arith.constant 1.000000e+00 : f32
    %40 = vector.broadcast %cst_15 : f32 to vector<2x1xf32>
    %41 = arith.addf %40, %39 : vector<2x1xf32>
    %cst_16 = arith.constant 1.000000e+00 : f32
    %42 = vector.broadcast %cst_16 : f32 to vector<2x1xf32>
    %43 = arith.divf %42, %41 : vector<2x1xf32>
    %c0_17 = arith.constant 0 : index
    %c0_18 = arith.constant 0 : index
    %44 = vector.load %arg7[%c0_17, %c0_18] : memref<2x1xf32, #tpu.memory_space<vmem>>, vector<2x1xf32>
    tpu.vector_store %arg7[%c0_17, %c0_18], %43 {strides = array<i32>} : memref<2x1xf32, #tpu.memory_space<vmem>>, vector<2x1xf32>,
    return
  }
  func.func @transform_0(%arg0: i32) -> i32 {
    %c0_i32 = arith.constant 0 : i32
    %c0_i32_0 = arith.constant 0 : i32
    return %c0_i32 : i32
  }
  func.func @transform_1(%arg0: i32) -> i32 {
    %c0_i32 = arith.constant 0 : i32
    %c0_i32_0 = arith.constant 0 : i32
    return %c0_i32 : i32
  }
  func.func @transform_2(%arg0: i32) -> i32 {
    %c0_i32 = arith.constant 0 : i32
    %c0_i32_0 = arith.constant 0 : i32
    return %c0_i32 : i32
  }
  func.func @transform_3(%arg0: i32) -> (i32, i32) {
    %c0_i32 = arith.constant 0 : i32
    %c0_i32_0 = arith.constant 0 : i32
    return %arg0, %c0_i32 : i32, i32
  }
  func.func @transform_4(%arg0: i32) -> (i32, i32) {
    %c0_i32 = arith.constant 0 : i32
    %c0_i32_0 = arith.constant 0 : i32
    %c0_i32_1 = arith.constant 0 : i32
    return %c0_i32, %c0_i32_0 : i32, i32
  }
  func.func @transform_5(%arg0: i32) -> (i32, i32) {
    %c0_i32 = arith.constant 0 : i32
    %c0_i32_0 = arith.constant 0 : i32
    %c0_i32_1 = arith.constant 0 : i32
    return %c0_i32, %c0_i32_0 : i32, i32
  }
  func.func @transform_6(%arg0: i32) -> (i32, i32) {
    %c0_i32 = arith.constant 0 : i32
    %c0_i32_0 = arith.constant 0 : i32
    return %arg0, %c0_i32 : i32, i32
  }
}

</mosaic_0001>

<llo_original>
// kernel: tpu_custom_call.1
$region0: #{tpu_custom_call.1}
  #allocation0 [shape = 'u32[]', space=smem, size = 0x4, offset = 0x4, fixed_abs, tag = 'smem constant byte address 0x4 - core index']
  #allocation1 [shape = 'u32[144,128]{1,0:T(1,128)}', space=vmem, size = 0x12000, scoped, tag = 'internal scratch']
  #allocation2 [shape = 'f32[1]{0:T(128)S(6)}', space=smem, size = 0x200, scoped, tag = 'scoped memory for tpu_custom_call.1']
  #allocation3 [shape = 'f32[1]{0:T(128)S(6)}', space=smem, size = 0x200, scoped, tag = 'scoped memory for tpu_custom_call.1']
  #allocation4 [shape = 'f32[1]{0:T(128)S(6)}', space=smem, size = 0x200, scoped, tag = 'scoped memory for tpu_custom_call.1']
  %s0 = inlined_call_operand.<no memory space> [shape: f32[1], index: 0, kind: input, shape index: {}]
  %s1 = inlined_call_operand.<no memory space> [shape: f32[1], index: 1, kind: input, shape index: {}]
  %s2 = inlined_call_operand.<no memory space> [shape: f32[1], index: 2, kind: input, shape index: {}]
  %s3 = inlined_call_operand.vmem [shape: f32[2,32], index: 3, kind: input, shape index: {}]
  %s4 = inlined_call_operand.vmem [shape: f32[1,32], index: 4, kind: input, shape index: {}]
  %s5 = inlined_call_operand.vmem [shape: f32[1,32], index: 5, kind: input, shape index: {}]
  %s6 = inlined_call_operand.vmem [shape: f32[2,1], index: 6, kind: output, shape index: {}]
  %s7 = sld [smem:[#allocation0]]
  $region34: #{tpu_custom_call.1} parent=0
    _
  %s9 = ssub.s32 1, %s7
  %s10 = scalar_select 0, %s9, %s7
  %11 = sst [smem:[#allocation2]] %s0
  %12 = sst [smem:[#allocation3]] %s1
  %13 = sst [smem:[#allocation4]] %s2
  // Predicated region
  $region2: #{tpu_custom_call.1} parent=0 // pred_check
    _
  $region3: #{tpu_custom_call.1} parent=0 // pred_check_branch
    %15 = sbr.rel (0) target = $region5
  $region4: #{tpu_custom_call.1} parent=0 // pred_region
    _
  $region5: #{tpu_custom_call.1} parent=0 // pred_fallthru
    _
  // Predicated region
  $region6: #{tpu_custom_call.1} parent=0 // pred_check
    _
  $region7: #{tpu_custom_call.1} parent=0 // pred_check_branch
    %17 = sbr.rel (0) target = $region9
  $region8: #{tpu_custom_call.1} parent=0 // pred_region
    _
  $region9: #{tpu_custom_call.1} parent=0 // pred_fallthru
    _
  // Predicated region
  $region10: #{tpu_custom_call.1} parent=0 // pred_check
    _
  $region11: #{tpu_custom_call.1} parent=0 // pred_check_branch
    %19 = sbr.rel (0) target = $region13
  $region12: #{tpu_custom_call.1} parent=0 // pred_region
    _
  $region13: #{tpu_custom_call.1} parent=0 // pred_fallthru
    _
  // Predicated region
  $region14: #{tpu_custom_call.1} parent=0 // pred_check
    _
  $region15: #{tpu_custom_call.1} parent=0 // pred_check_branch
    %21 = sbr.rel (0) target = $region17
  $region16: #{tpu_custom_call.1} parent=0 // pred_region
    _
  $region17: #{tpu_custom_call.1} parent=0 // pred_fallthru
    _
  // Predicated region
  $region18: #{tpu_custom_call.1} parent=0 // pred_check
    _
  $region19: #{tpu_custom_call.1} parent=0 // pred_check_branch
    %23 = sbr.rel (0) target = $region21
  $region20: #{tpu_custom_call.1} parent=0 // pred_region
    _
  $region21: #{tpu_custom_call.1} parent=0 // pred_fallthru
    _
  // Predicated region
  $region22: #{tpu_custom_call.1} parent=0 // pred_check
    _
  $region23: #{tpu_custom_call.1} parent=0 // pred_check_branch
    %25 = sbr.rel (0) target = $region25
  $region24: #{tpu_custom_call.1} parent=0 // pred_region
    _
  $region25: #{tpu_custom_call.1} parent=0 // pred_fallthru
    _
  %v26 = vld [vmem:[%s3] sm:$0x3]
  %v27 = vmul.f32 %v26, 5.656854
  %v28 = vld [vmem:[%s4] sm:$0x1]
  %v30 = vlaneseq
  %v31 = vshrl.u32 %v30, 7
  %v32 = vsub.s32 0, %v31
  %v33 = vrot.slane %v28, %v32
  %v35 = vadd.f32 %v27, %v33
  %vm36 = vcmask 254976
  %v37 = vsel %vm36, %v35, 0.0
  %38 = vadd.xlane.f32.xlu0 %v37
  %v39 = vpop.xlane.xlu0 %38
  %v40 = vrcp.pop 32.0
  %v41 = vmul.f32 %v39, %v40
  %v42 = vsub.f32 %v35, %v41
  %v43 = vmul.f32 %v42, %v42
  %v44 = vsel %vm36, %v43, 0.0
  %45 = vadd.xlane.f32.xlu0 %v44
  %v46 = vpop.xlane.xlu0 %45
  %v47 = vrcp.pop 31.0
  %v48 = vmul.f32 %v46, %v47
  %v49 = vrsqrt.pop %v48
  %v50 = vmul.f32 %v48, %v49
  %vm51 = vcmp.eq.f32.partialorder %v48, inf
  %v52 = vsel %vm51, %v48, %v50
  %vm53 = vcmp.eq.f32.partialorder %v48, 0.0
  %v54 = vand.u32 %v48, 2147483648
  %v55 = vsel %vm53, %v54, %v52
  %s56 = sld [smem:[#allocation2]]
  %v57 = vadd.f32 %v55, 1e-06
  %v58 = vrcp.pop %v57
  %v59 = vstv %s56
  %v60 = vmul.f32 %v59, %v58
  %v61 = vmul.f32 %v42, %v60
  %s62 = sld [smem:[#allocation3]]
  %v63 = vstv %s62
  %v64 = vadd.f32 %v61, %v63
  %v65 = vld [vmem:[%s5] sm:$0x1]
  %v67 = vlaneseq
  %v68 = vshrl.u32 %v67, 7
  %v69 = vsub.s32 0, %v68
  %v70 = vrot.slane %v65, %v69
  %v72 = vmul.f32 %v64, %v70
  %v73 = vsel %vm36, %v72, 0.0
  %74 = vadd.xlane.f32.xlu0 %v73
  %v75 = vpop.xlane.xlu0 %74
  %s76 = sld [smem:[#allocation4]]
  %v77 = vstv %s76
  %v78 = vadd.f32 %v75, %v77
  %v79 = vsub.f32 0.0, %v78
  %v80 = vmul.f32 %v79, 1.442695
  %v81 = vpow.pop %v80
  %v82 = vadd.f32 %v81, 1.0
  %v83 = vrcp.pop %v82
  %v84 = vmul.f32 1.0, %v83
  %vm85 = vcmask 1024
  %86 = vst.msk [vmem:[%s6] sm:$0x3] %vm85, %v84
  // Predicated region
  $region26: #{tpu_custom_call.1} parent=0 // pred_check
    _
  $region27: #{tpu_custom_call.1} parent=0 // pred_check_branch
    %88 = sbr.rel (0) target = $region29
  $region28: #{tpu_custom_call.1} parent=0 // pred_region
    _
  $region29: #{tpu_custom_call.1} parent=0 // pred_fallthru
    _
  // Predicated region
  $region30: #{tpu_custom_call.1} parent=0 // pred_check
    _
  $region31: #{tpu_custom_call.1} parent=0 // pred_check_branch
    %90 = sbr.rel (0) target = $region33
  $region32: #{tpu_custom_call.1} parent=0 // pred_region
    _
  $region33: #{tpu_custom_call.1} parent=0 // pred_fallthru
    _

</llo_original>
